<compile_context>
chip_gen: v5e
topology: v5e:2x2
jax: 0.10.0
libtpu: 0.0.40
codegen_flags: <defaults>
</compile_context>

<pallas_src>
import jax
import jax.numpy as jnp
from jax.experimental import pallas as pl
from jax.experimental.pallas import tpu as pltpu

BN_EPS = 1e-5


# ---------------------------------------------------------------------------
# Pallas kernel: the entire CBW block for one block of Bt images
# ---------------------------------------------------------------------------
def _cbw_kernel(x_ref, m1t_ref, m2t_ref, sc_ref, o_ref):
    """x_ref  : (Bt, C, HWp) f32  image block; lanes beyond H*W are zero padding
       m1t_ref: (C, C)       f32  transposed band matrix, conv1d_1  (BN1 scale folded)
       m2t_ref: (C, C)       f32  transposed band matrix, conv1d_12 (BN2 scale folded)
       sc_ref : (5,)   SMEM  f32  [bn1_shift, bn2_shift, bn3_scale, bn3_shift, 1/(H*W)]
       o_ref  : (Bt, C, HWp) f32
    """
    # Global average pool over the spatial lanes; zero pad columns don't perturb the
    # sum and the true divisor 1/(H*W) comes from SMEM, not the padded block shape.
    s = jnp.sum(x_ref[...], axis=-1) * sc_ref[4]                       # (Bt, C)

    # conv1d_1 + BatchNorm1d + ReLU : batched (Bt,C) @ (C,C) on the MXU
    out1 = jnp.maximum(
        jnp.dot(s, m1t_ref[...], preferred_element_type=jnp.float32) + sc_ref[0], 0.0)

    # conv1d_12 + BatchNorm1d + ReLU
    out2 = jnp.maximum(
        jnp.dot(out1, m2t_ref[...], preferred_element_type=jnp.float32) + sc_ref[1], 0.0)

    # residual sum + BatchNorm1d + sigmoid -> per-(image, channel) gate
    t = (out1 + out2 + s) * sc_ref[2] + sc_ref[3]
    gate = pl.reciprocal(1.0 + jnp.exp(-t), approx=True)               # (Bt, C)

    # Streaming epilogue: re-read x_ref so only the small gate is live here
    # (straight vld -> vmul -> vst over the lane-dense tile).
    o_ref[...] = x_ref[...] * gate[:, :, None]


# ---------------------------------------------------------------------------
# Trace-time weight preparation (BN folding + transposed band matrix for the conv)
# ---------------------------------------------------------------------------
def _band_matrix_t(w7, C):
    """(C, C) matrix W with W[j, i] = w7[j - i + 3] inside the 7-wide band, else 0.

    Then (s @ W)[i] = sum_k w7[k] * s[i + k - 3], i.e. exactly
    Conv1d(1, 1, 7, stride=1, padding=3, bias=False) along the channel axis
    (PyTorch cross-correlation convention, zero padding), with the LHS batched
    over images so the MXU weight push is amortized across the block.
    """
    j = jnp.arange(C)[:, None]   # input-channel index (rows)
    i = jnp.arange(C)[None, :]   # output-channel index (cols)
    d = j - i + 3
    band = (d >= 0) & (d <= 6)
    return jnp.where(band, w7[jnp.clip(d, 0, 6)], 0.0).astype(jnp.float32)


def _bn_fold(p):
    scale = p["gamma"] / jnp.sqrt(p["var"] + BN_EPS)
    shift = p["beta"] - p["mean"] * scale
    return scale.astype(jnp.float32), shift.astype(jnp.float32)


# ---------------------------------------------------------------------------
# Public forward
# ---------------------------------------------------------------------------
def cbw_basic_block_forward(x_nchw, params, patch_size=11, block_batch=16):
    B, C, H, W = x_nchw.shape
    # The PyTorch forward only works when the pooled map is (B, C, 1, 1).
    assert H == patch_size and W == patch_size, "forward requires H == W == patch_size"
    HW = H * W
    HWp = max(128, ((HW + 127) // 128) * 128)     # lane-dense spatial axis
    Bt = min(block_batch, B)                      # images per grid step
    Bp = ((B + Bt - 1) // Bt) * Bt                # batch padded to a multiple of Bt

    x3 = x_nchw.reshape(B, C, HW).astype(jnp.float32)
    if (Bp - B) or (HWp - HW):
        x3 = jnp.pad(x3, ((0, Bp - B), (0, 0), (0, HWp - HW)))

    s1, t1 = _bn_fold(params["bn1"])
    s2, t2 = _bn_fold(params["bn2"])
    s3, t3 = _bn_fold(params["bn3"])
    m1t = _band_matrix_t(params["conv1d_1_w"], C) * s1     # fold BN scale into conv weights
    m2t = _band_matrix_t(params["conv1d_12_w"], C) * s2
    scalars = jnp.stack(
        [t1, t2, s3, t3, jnp.float32(1.0 / HW)]).astype(jnp.float32)   # (5,) -> SMEM

    out = pl.pallas_call(
        _cbw_kernel,
        out_shape=jax.ShapeDtypeStruct((Bp, C, HWp), jnp.float32),
        grid=(Bp // Bt,),
        in_specs=[
            pl.BlockSpec((Bt, C, HWp), lambda b: (b, 0, 0)),
            pl.BlockSpec((C, C), lambda b: (0, 0)),          # weights stay VMEM-resident
            pl.BlockSpec((C, C), lambda b: (0, 0)),
            pl.BlockSpec(memory_space=pltpu.MemorySpace.SMEM),
        ],
        out_specs=pl.BlockSpec((Bt, C, HWp), lambda b: (b, 0, 0)),
        compiler_params=pltpu.CompilerParams(
            dimension_semantics=("parallel",)),               # batch blocks across TCs
    )(x3, m1t, m2t, scalars)

    return out[:B, :, :HW].reshape(B, C, H, W)


# ---------------------------------------------------------------------------
# Deterministic synthetic parameters + pure-JAX reference
# ---------------------------------------------------------------------------
def _bn_params(key):
    k1, k2, k3, k4 = jax.random.split(key, 4)
    return dict(
        gamma=1.0 + 0.1 * jax.random.normal(k1, (), jnp.float32),
        beta=0.1 * jax.random.normal(k2, (), jnp.float32),
        mean=0.1 * jax.random.normal(k3, (), jnp.float32),
        var=1.0 + 0.1 * jnp.abs(jax.random.normal(k4, (), jnp.float32)),
    )


def init_params(key):
    k = jax.random.split(key, 5)
    return {
        "conv1d_1_w":  jax.random.normal(k[0], (7,), jnp.float32) * (1.0 / 7.0) ** 0.5,
        "conv1d_12_w": jax.random.normal(k[1], (7,), jnp.float32) * (1.0 / 7.0) ** 0.5,
        "bn1": _bn_params(k[2]),
        "bn2": _bn_params(k[3]),
        "bn3": _bn_params(k[4]),
    }


def _reference_forward(x, params):
    B, C, H, W = x.shape
    s = jnp.mean(x, axis=(2, 3))                            # AvgPool2d(H) -> squeeze -> transpose

    def bn(v, p):
        return (v - p["mean"]) / jnp.sqrt(p["var"] + BN_EPS) * p["gamma"] + p["beta"]

    def conv7(v, w7):                                       # Conv1d(1,1,7,pad=3,bias=False) along C
        vp = jnp.pad(v, ((0, 0), (3, 3)))
        f = lambda r: jnp.correlate(r, w7, mode="valid",
                                    precision=jax.lax.Precision.HIGHEST)
        return jax.vmap(f)(vp)

    out0 = s
    out1 = jax.nn.relu(bn(conv7(out0, params["conv1d_1_w"]), params["bn1"]))
    out2 = jax.nn.relu(bn(conv7(out1, params["conv1d_12_w"]), params["bn2"]))
    gate = jax.nn.sigmoid(bn(out1 + out2 + out0, params["bn3"]))
    return x * gate[:, :, None, None]


# ---------------------------------------------------------------------------
if __name__ == "__main__":
    B, C, PATCH = 4, 128, 11        # H == W == patch_size (module default patch_size=11)
    key = jax.random.PRNGKey(0)
    kx, kp = jax.random.split(key)
    x = jax.random.normal(kx, (B, C, PATCH, PATCH), jnp.float32)
    params = init_params(kp)

    fwd = jax.jit(lambda xx, pp: cbw_basic_block_forward(xx, pp, patch_size=PATCH))
    out = jax.block_until_ready(fwd(x, params))
    assert out.shape == (B, C, PATCH, PATCH), out.shape

    ref = _reference_forward(x, params)
    rel = float(jnp.linalg.norm(out - ref) / (jnp.linalg.norm(ref) + 1e-6))
    assert rel < 1e-2, f"kernel/reference mismatch: rel={rel}"
    print("KERNEL_OK")
</pallas_src>

<mosaic_0001>
module attributes {stable_mosaic.version = 11 : i64} {
  func.func @_cbw_kernel(%arg0: i32, %arg1: memref<4x128x128xf32, #tpu.memory_space<vmem>>, %arg2: memref<128x128xf32, #tpu.memory_space<vmem>>, %arg3: memref<128x128xf32, #tpu.memory_space<vmem>>, %arg4: memref<5xf32, #tpu.memory_space<smem>>, %arg5: memref<4x128x128xf32, #tpu.memory_space<vmem>>) attributes {dimension_semantics = [#tpu.dimension_semantics<parallel>], iteration_bounds = array<i64: 1>, scalar_prefetch = 0 : i64, scratch_operands = 0 : i64, tpu.core_type = #tpu.core_type<tc>, window_params = [{transform_indices = @transform_0, window_bounds = array<i64: 4, 128, 128>}, {pipeline_mode = #tpu.pipeline_mode<synchronous>, transform_indices = @transform_1, window_bounds = array<i64: 128, 128>}, {pipeline_mode = #tpu.pipeline_mode<synchronous>, transform_indices = @transform_2, window_bounds = array<i64: 128, 128>}, {transform_indices = @transform_3, window_bounds = array<i64: 5>}, {transform_indices = @transform_4, window_bounds = array<i64: 4, 128, 128>}]} {
    %c0 = arith.constant 0 : index
    %c0_0 = arith.constant 0 : index
    %c0_1 = arith.constant 0 : index
    %0 = vector.load %arg1[%c0, %c0_0, %c0_1] : memref<4x128x128xf32, #tpu.memory_space<vmem>>, vector<4x128x128xf32>
    %cst = arith.constant dense<0.000000e+00> : vector<4x128xf32>
    %1 = vector.multi_reduction <add>, %0, %cst [2] : vector<4x128x128xf32> to vector<4x128xf32>
    %c4 = arith.constant 4 : index
    %2 = memref.load %arg4[%c4] : memref<5xf32, #tpu.memory_space<smem>>
    %3 = vector.broadcast %2 : f32 to vector<4x128xf32>
    %4 = arith.mulf %1, %3 : vector<4x128xf32>
    %c0_2 = arith.constant 0 : index
    %c0_3 = arith.constant 0 : index
    %5 = vector.load %arg2[%c0_2, %c0_3] : memref<128x128xf32, #tpu.memory_space<vmem>>, vector<128x128xf32>
    %cst_4 = arith.constant dense<0.000000e+00> : vector<4x128xf32>
    %6 = tpu.matmul %4, %5, %cst_4 {dimension_numbers = #tpu.dot_dimension_numbers<[1], [0], [0], [1], [0, 0, 1, 1], [], []>} : vector<4x128xf32>, vector<128x128xf32>, vector<4x128xf32> -> vector<4x128xf32>
    %c0_5 = arith.constant 0 : index
    %7 = memref.load %arg4[%c0_5] : memref<5xf32, #tpu.memory_space<smem>>
    %8 = vector.broadcast %7 : f32 to vector<4x128xf32>
    %9 = arith.addf %6, %8 : vector<4x128xf32>
    %cst_6 = arith.constant 0.000000e+00 : f32
    %10 = vector.broadcast %cst_6 : f32 to vector<4x128xf32>
    %11 = arith.maximumf %9, %10 : vector<4x128xf32>
    %c0_7 = arith.constant 0 : index
    %c0_8 = arith.constant 0 : index
    %12 = vector.load %arg3[%c0_7, %c0_8] : memref<128x128xf32, #tpu.memory_space<vmem>>, vector<128x128xf32>
    %cst_9 = arith.constant dense<0.000000e+00> : vector<4x128xf32>
    %13 = tpu.matmul %11, %12, %cst_9 {dimension_numbers = #tpu.dot_dimension_numbers<[1], [0], [0], [1], [0, 0, 1, 1], [], []>} : vector<4x128xf32>, vector<128x128xf32>, vector<4x128xf32> -> vector<4x128xf32>
    %c1 = arith.constant 1 : index
    %14 = memref.load %arg4[%c1] : memref<5xf32, #tpu.memory_space<smem>>
    %15 = vector.broadcast %14 : f32 to vector<4x128xf32>
    %16 = arith.addf %13, %15 : vector<4x128xf32>
    %cst_10 = arith.constant 0.000000e+00 : f32
    %17 = vector.broadcast %cst_10 : f32 to vector<4x128xf32>
    %18 = arith.maximumf %16, %17 : vector<4x128xf32>
    %19 = arith.addf %11, %18 : vector<4x128xf32>
    %20 = arith.addf %19, %4 : vector<4x128xf32>
    %c2 = arith.constant 2 : index
    %21 = memref.load %arg4[%c2] : memref<5xf32, #tpu.memory_space<smem>>
    %22 = vector.broadcast %21 : f32 to vector<4x128xf32>
    %23 = arith.mulf %20, %22 : vector<4x128xf32>
    %c3 = arith.constant 3 : index
    %24 = memref.load %arg4[%c3] : memref<5xf32, #tpu.memory_space<smem>>
    %25 = vector.broadcast %24 : f32 to vector<4x128xf32>
    %26 = arith.addf %23, %25 : vector<4x128xf32>
    %cst_11 = arith.constant 0.000000e+00 : f32
    %27 = vector.broadcast %cst_11 : f32 to vector<4x128xf32>
    %28 = arith.subf %27, %26 : vector<4x128xf32>
    %29 = math.exp %28 : vector<4x128xf32>
    %cst_12 = arith.constant 1.000000e+00 : f32
    %30 = vector.broadcast %cst_12 : f32 to vector<4x128xf32>
    %31 = arith.addf %30, %29 : vector<4x128xf32>
    %32 = tpu.reciprocal %31 {approx = true} : vector<4x128xf32> -> vector<4x128xf32>
    %c0_13 = arith.constant 0 : index
    %c0_14 = arith.constant 0 : index
    %c0_15 = arith.constant 0 : index
    %33 = vector.load %arg1[%c0_13, %c0_14, %c0_15] : memref<4x128x128xf32, #tpu.memory_space<vmem>>, vector<4x128x128xf32>
    %34 = vector.shape_cast %32 : vector<4x128xf32> to vector<4x128x1xf32>
    %35 = vector.broadcast %34 : vector<4x128x1xf32> to vector<4x128x128xf32>
    %36 = arith.mulf %33, %35 : vector<4x128x128xf32>
    %c0_16 = arith.constant 0 : index
    %c0_17 = arith.constant 0 : index
    %c0_18 = arith.constant 0 : index
    %37 = vector.load %arg5[%c0_16, %c0_17, %c0_18] : memref<4x128x128xf32, #tpu.memory_space<vmem>>, vector<4x128x128xf32>
    tpu.vector_store %arg5[%c0_16, %c0_17, %c0_18], %36 {strides = array<i32>} : memref<4x128x128xf32, #tpu.memory_space<vmem>>, vector<4x128x128xf32>,
    return
  }
  func.func @transform_0(%arg0: i32) -> (i32, i32, i32) {
    %c0_i32 = arith.constant 0 : i32
    %c0_i32_0 = arith.constant 0 : i32
    %c0_i32_1 = arith.constant 0 : i32
    return %arg0, %c0_i32, %c0_i32_0 : i32, i32, i32
  }
  func.func @transform_1(%arg0: i32) -> (i32, i32) {
    %c0_i32 = arith.constant 0 : i32
    %c0_i32_0 = arith.constant 0 : i32
    %c0_i32_1 = arith.constant 0 : i32
    return %c0_i32, %c0_i32_0 : i32, i32
  }
  func.func @transform_2(%arg0: i32) -> (i32, i32) {
    %c0_i32 = arith.constant 0 : i32
    %c0_i32_0 = arith.constant 0 : i32
    %c0_i32_1 = arith.constant 0 : i32
    return %c0_i32, %c0_i32_0 : i32, i32
  }
  func.func @transform_3(%arg0: i32) -> i32 {
    %c0_i32 = arith.constant 0 : i32
    %c0_i32_0 = arith.constant 0 : i32
    return %c0_i32 : i32
  }
  func.func @transform_4(%arg0: i32) -> (i32, i32, i32) {
    %c0_i32 = arith.constant 0 : i32
    %c0_i32_0 = arith.constant 0 : i32
    %c0_i32_1 = arith.constant 0 : i32
    return %arg0, %c0_i32, %c0_i32_0 : i32, i32, i32
  }
}

</mosaic_0001>

<llo_original>
// kernel: _lambda_.1
$region0: #{_lambda_.1}
  #allocation0 [shape = 'u32[]', space=smem, size = 0x4, offset = 0x4, fixed_abs, tag = 'smem constant byte address 0x4 - core index']
  #allocation1 [shape = 'u32[72,128]{1,0:T(1,128)}', space=vmem, size = 0x9000, scoped, tag = 'internal scratch']
  %s0 = inlined_call_operand.vmem [shape: f32[4,128,128], index: 0, kind: input, shape index: {}]
  %s1 = inlined_call_operand.vmem [shape: f32[128,128], index: 1, kind: input, shape index: {}]
  %s2 = inlined_call_operand.vmem [shape: f32[128,128], index: 2, kind: input, shape index: {}]
  %s3 = inlined_call_operand.vmem [shape: f32[5], index: 3, kind: input, shape index: {}]
  %s4 = inlined_call_operand.vmem [shape: f32[4,128,128], index: 4, kind: output, shape index: {}]
  %s5 = sld [smem:[#allocation0]]
  $region30: #{_lambda_.1} parent=0
    _
  %s7 = ssub.s32 1, %s5
  %s8 = scalar_select 0, %s7, %s5
  $region1: #{_lambda_.1} parent=0
    #allocation2 [shape = 'u8[512]{0}', space=smem, size = 0x200, scoped, tag = 'input window, operand 3, single buffered']
    #allocation3 [shape = 's32[1]{0}', space=sflag, size = 0x4, scoped, tag = 'scoped memory for _lambda_.1']
    %9 = vsyncpa [#allocation3], 0
    // Predicated region
    $region2: #{_lambda_.1} parent=1 // pred_check
      _
    $region3: #{_lambda_.1} parent=1 // pred_check_branch
      %11 = sbr.rel (0) target = $region5
    $region4: #{_lambda_.1} parent=1 // pred_region
      _
    $region5: #{_lambda_.1} parent=1 // pred_fallthru
      _
    // Predicated region
    $region6: #{_lambda_.1} parent=1 // pred_check
      _
    $region7: #{_lambda_.1} parent=1 // pred_check_branch
      %13 = sbr.rel (0) target = $region9
    $region8: #{_lambda_.1} parent=1 // pred_region
      _
    $region9: #{_lambda_.1} parent=1 // pred_fallthru
      _
    // Predicated region
    $region10: #{_lambda_.1} parent=1 // pred_check
      _
    $region11: #{_lambda_.1} parent=1 // pred_check_branch
      %15 = sbr.rel (0) target = $region13
    $region12: #{_lambda_.1} parent=1 // pred_region
      _
    $region13: #{_lambda_.1} parent=1 // pred_fallthru
      _
    // Predicated region
    $region14: #{_lambda_.1} parent=1 // pred_check
      _
    $region15: #{_lambda_.1} parent=1 // pred_check_branch
      %17 = sbr.rel (0) target = $region17
    $region16: #{_lambda_.1} parent=1 // pred_region
      %19 = vsyncadd [#allocation3], 0
      %s21 = sshll.u32 %s3, 4
      %s22 = int_to_ptr.vmem [resolvable:$true] %s21
      %24 = dma.vmem_to_smem %s22, 16, [#allocation2], [#allocation3]
    $region17: #{_lambda_.1} parent=1 // pred_fallthru
      _
    // Predicated region
    $region18: #{_lambda_.1} parent=1 // pred_check
      _
    $region19: #{_lambda_.1} parent=1 // pred_check_branch
      %26 = sbr.rel (0) target = $region21
    $region20: #{_lambda_.1} parent=1 // pred_region
      %28 = dma.done [#allocation3], 16
    $region21: #{_lambda_.1} parent=1 // pred_fallthru
      _
    %29 = sfence
    %v30 = vld [vmem:[%s0] sm:$0xff]
    %v31 = vld [vmem:[%s0 + $0x8] sm:$0xff]
    %v32 = vld [vmem:[%s0 + $0x10] sm:$0xff]
    %v33 = vld [vmem:[%s0 + $0x18] sm:$0xff]
    %v34 = vld [vmem:[%s0 + $0x20] sm:$0xff]
    %v35 = vld [vmem:[%s0 + $0x28] sm:$0xff]
    %v36 = vld [vmem:[%s0 + $0x30] sm:$0xff]
    %v37 = vld [vmem:[%s0 + $0x38] sm:$0xff]
    %v38 = vld [vmem:[%s0 + $0x40] sm:$0xff]
    %v39 = vld [vmem:[%s0 + $0x48] sm:$0xff]
    %v40 = vld [vmem:[%s0 + $0x50] sm:$0xff]
    %v41 = vld [vmem:[%s0 + $0x58] sm:$0xff]
    %v42 = vld [vmem:[%s0 + $0x60] sm:$0xff]
    %v43 = vld [vmem:[%s0 + $0x68] sm:$0xff]
    %v44 = vld [vmem:[%s0 + $0x70] sm:$0xff]
    %v45 = vld [vmem:[%s0 + $0x78] sm:$0xff]
    %v46 = vld [vmem:[%s0 + $0x80] sm:$0xff]
    %v47 = vld [vmem:[%s0 + $0x88] sm:$0xff]
    %v48 = vld [vmem:[%s0 + $0x90] sm:$0xff]
    %v49 = vld [vmem:[%s0 + $0x98] sm:$0xff]
    %v50 = vld [vmem:[%s0 + $0xa0] sm:$0xff]
    %v51 = vld [vmem:[%s0 + $0xa8] sm:$0xff]
    %v52 = vld [vmem:[%s0 + $0xb0] sm:$0xff]
    %v53 = vld [vmem:[%s0 + $0xb8] sm:$0xff]
    %v54 = vld [vmem:[%s0 + $0xc0] sm:$0xff]
    %v55 = vld [vmem:[%s0 + $0xc8] sm:$0xff]
    %v56 = vld [vmem:[%s0 + $0xd0] sm:$0xff]
    %v57 = vld [vmem:[%s0 + $0xd8] sm:$0xff]
    %v58 = vld [vmem:[%s0 + $0xe0] sm:$0xff]
    %v59 = vld [vmem:[%s0 + $0xe8] sm:$0xff]
    %v60 = vld [vmem:[%s0 + $0xf0] sm:$0xff]
    %v61 = vld [vmem:[%s0 + $0xf8] sm:$0xff]
    %v62 = vld [vmem:[%s0 + $0x100] sm:$0xff]
    %v63 = vld [vmem:[%s0 + $0x108] sm:$0xff]
    %v64 = vld [vmem:[%s0 + $0x110] sm:$0xff]
    %v65 = vld [vmem:[%s0 + $0x118] sm:$0xff]
    %v66 = vld [vmem:[%s0 + $0x120] sm:$0xff]
    %v67 = vld [vmem:[%s0 + $0x128] sm:$0xff]
    %v68 = vld [vmem:[%s0 + $0x130] sm:$0xff]
    %v69 = vld [vmem:[%s0 + $0x138] sm:$0xff]
    %v70 = vld [vmem:[%s0 + $0x140] sm:$0xff]
    %v71 = vld [vmem:[%s0 + $0x148] sm:$0xff]
    %v72 = vld [vmem:[%s0 + $0x150] sm:$0xff]
    %v73 = vld [vmem:[%s0 + $0x158] sm:$0xff]
    %v74 = vld [vmem:[%s0 + $0x160] sm:$0xff]
    %v75 = vld [vmem:[%s0 + $0x168] sm:$0xff]
    %v76 = vld [vmem:[%s0 + $0x170] sm:$0xff]
    %v77 = vld [vmem:[%s0 + $0x178] sm:$0xff]
    %v78 = vld [vmem:[%s0 + $0x180] sm:$0xff]
    %v79 = vld [vmem:[%s0 + $0x188] sm:$0xff]
    %v80 = vld [vmem:[%s0 + $0x190] sm:$0xff]
    %v81 = vld [vmem:[%s0 + $0x198] sm:$0xff]
    %v82 = vld [vmem:[%s0 + $0x1a0] sm:$0xff]
    %v83 = vld [vmem:[%s0 + $0x1a8] sm:$0xff]
    %v84 = vld [vmem:[%s0 + $0x1b0] sm:$0xff]
    %v85 = vld [vmem:[%s0 + $0x1b8] sm:$0xff]
    %v86 = vld [vmem:[%s0 + $0x1c0] sm:$0xff]
    %v87 = vld [vmem:[%s0 + $0x1c8] sm:$0xff]
    %v88 = vld [vmem:[%s0 + $0x1d0] sm:$0xff]
    %v89 = vld [vmem:[%s0 + $0x1d8] sm:$0xff]
    %v90 = vld [vmem:[%s0 + $0x1e0] sm:$0xff]
    %v91 = vld [vmem:[%s0 + $0x1e8] sm:$0xff]
    %v92 = vld [vmem:[%s0 + $0x1f0] sm:$0xff]
    %v93 = vld [vmem:[%s0 + $0x1f8] sm:$0xff]
    %94 = vadd.xlane.f32.xlu0 %v30
    %v95 = vpop.xlane.xlu0 %94
    %96 = vadd.xlane.f32.xlu0 %v31
    %v97 = vpop.xlane.xlu0 %96
    %98 = vadd.xlane.f32.xlu0 %v32
    %v99 = vpop.xlane.xlu0 %98
    %100 = vadd.xlane.f32.xlu0 %v33
    %v101 = vpop.xlane.xlu0 %100
    %102 = vadd.xlane.f32.xlu0 %v34
    %v103 = vpop.xlane.xlu0 %102
    %104 = vadd.xlane.f32.xlu0 %v35
    %v105 = vpop.xlane.xlu0 %104
    %106 = vadd.xlane.f32.xlu0 %v36
    %v107 = vpop.xlane.xlu0 %106
    %108 = vadd.xlane.f32.xlu0 %v37
    %v109 = vpop.xlane.xlu0 %108
    %110 = vadd.xlane.f32.xlu0 %v38
    %v111 = vpop.xlane.xlu0 %110
    %112 = vadd.xlane.f32.xlu0 %v39
    %v113 = vpop.xlane.xlu0 %112
    %114 = vadd.xlane.f32.xlu0 %v40
    %v115 = vpop.xlane.xlu0 %114
    %116 = vadd.xlane.f32.xlu0 %v41
    %v117 = vpop.xlane.xlu0 %116
    %118 = vadd.xlane.f32.xlu0 %v42
    %v119 = vpop.xlane.xlu0 %118
    %120 = vadd.xlane.f32.xlu0 %v43
    %v121 = vpop.xlane.xlu0 %120
    %122 = vadd.xlane.f32.xlu0 %v44
    %v123 = vpop.xlane.xlu0 %122
    %124 = vadd.xlane.f32.xlu0 %v45
    %v125 = vpop.xlane.xlu0 %124
    %126 = vadd.xlane.f32.xlu0 %v46
    %v127 = vpop.xlane.xlu0 %126
    %128 = vadd.xlane.f32.xlu0 %v47
    %v129 = vpop.xlane.xlu0 %128
    %130 = vadd.xlane.f32.xlu0 %v48
    %v131 = vpop.xlane.xlu0 %130
    %132 = vadd.xlane.f32.xlu0 %v49
    %v133 = vpop.xlane.xlu0 %132
    %134 = vadd.xlane.f32.xlu0 %v50
    %v135 = vpop.xlane.xlu0 %134
    %136 = vadd.xlane.f32.xlu0 %v51
    %v137 = vpop.xlane.xlu0 %136
    %138 = vadd.xlane.f32.xlu0 %v52
    %v139 = vpop.xlane.xlu0 %138
    %140 = vadd.xlane.f32.xlu0 %v53
    %v141 = vpop.xlane.xlu0 %140
    %142 = vadd.xlane.f32.xlu0 %v54
    %v143 = vpop.xlane.xlu0 %142
    %144 = vadd.xlane.f32.xlu0 %v55
    %v145 = vpop.xlane.xlu0 %144
    %146 = vadd.xlane.f32.xlu0 %v56
    %v147 = vpop.xlane.xlu0 %146
    %148 = vadd.xlane.f32.xlu0 %v57
    %v149 = vpop.xlane.xlu0 %148
    %150 = vadd.xlane.f32.xlu0 %v58
    %v151 = vpop.xlane.xlu0 %150
    %152 = vadd.xlane.f32.xlu0 %v59
    %v153 = vpop.xlane.xlu0 %152
    %154 = vadd.xlane.f32.xlu0 %v60
    %v155 = vpop.xlane.xlu0 %154
    %156 = vadd.xlane.f32.xlu0 %v61
    %v157 = vpop.xlane.xlu0 %156
    %158 = vadd.xlane.f32.xlu0 %v62
    %v159 = vpop.xlane.xlu0 %158
    %160 = vadd.xlane.f32.xlu0 %v63
    %v161 = vpop.xlane.xlu0 %160
    %162 = vadd.xlane.f32.xlu0 %v64
    %v163 = vpop.xlane.xlu0 %162
    %164 = vadd.xlane.f32.xlu0 %v65
    %v165 = vpop.xlane.xlu0 %164
    %166 = vadd.xlane.f32.xlu0 %v66
    %v167 = vpop.xlane.xlu0 %166
    %168 = vadd.xlane.f32.xlu0 %v67
    %v169 = vpop.xlane.xlu0 %168
    %170 = vadd.xlane.f32.xlu0 %v68
    %v171 = vpop.xlane.xlu0 %170
    %172 = vadd.xlane.f32.xlu0 %v69
    %v173 = vpop.xlane.xlu0 %172
    %174 = vadd.xlane.f32.xlu0 %v70
    %v175 = vpop.xlane.xlu0 %174
    %176 = vadd.xlane.f32.xlu0 %v71
    %v177 = vpop.xlane.xlu0 %176
    %178 = vadd.xlane.f32.xlu0 %v72
    %v179 = vpop.xlane.xlu0 %178
    %180 = vadd.xlane.f32.xlu0 %v73
    %v181 = vpop.xlane.xlu0 %180
    %182 = vadd.xlane.f32.xlu0 %v74
    %v183 = vpop.xlane.xlu0 %182
    %184 = vadd.xlane.f32.xlu0 %v75
    %v185 = vpop.xlane.xlu0 %184
    %186 = vadd.xlane.f32.xlu0 %v76
    %v187 = vpop.xlane.xlu0 %186
    %188 = vadd.xlane.f32.xlu0 %v77
    %v189 = vpop.xlane.xlu0 %188
    %190 = vadd.xlane.f32.xlu0 %v78
    %v191 = vpop.xlane.xlu0 %190
    %192 = vadd.xlane.f32.xlu0 %v79
    %v193 = vpop.xlane.xlu0 %192
    %194 = vadd.xlane.f32.xlu0 %v80
    %v195 = vpop.xlane.xlu0 %194
    %196 = vadd.xlane.f32.xlu0 %v81
    %v197 = vpop.xlane.xlu0 %196
    %198 = vadd.xlane.f32.xlu0 %v82
    %v199 = vpop.xlane.xlu0 %198
    %200 = vadd.xlane.f32.xlu0 %v83
    %v201 = vpop.xlane.xlu0 %200
    %202 = vadd.xlane.f32.xlu0 %v84
    %v203 = vpop.xlane.xlu0 %202
    %204 = vadd.xlane.f32.xlu0 %v85
    %v205 = vpop.xlane.xlu0 %204
    %206 = vadd.xlane.f32.xlu0 %v86
    %v207 = vpop.xlane.xlu0 %206
    %208 = vadd.xlane.f32.xlu0 %v87
    %v209 = vpop.xlane.xlu0 %208
    %210 = vadd.xlane.f32.xlu0 %v88
    %v211 = vpop.xlane.xlu0 %210
    %212 = vadd.xlane.f32.xlu0 %v89
    %v213 = vpop.xlane.xlu0 %212
    %214 = vadd.xlane.f32.xlu0 %v90
    %v215 = vpop.xlane.xlu0 %214
    %216 = vadd.xlane.f32.xlu0 %v91
    %v217 = vpop.xlane.xlu0 %216
    %218 = vadd.xlane.f32.xlu0 %v92
    %v219 = vpop.xlane.xlu0 %218
    %220 = vadd.xlane.f32.xlu0 %v93
    %v221 = vpop.xlane.xlu0 %220
    %s222 = sld [smem:[#allocation2 + $0x4]]
    %v223 = vstv %s222
    %v224 = vmul.f32 %v95, %v223
    %v225 = vmul.f32 %v97, %v223
    %v226 = vmul.f32 %v99, %v223
    %v227 = vmul.f32 %v101, %v223
    %v228 = vmul.f32 %v103, %v223
    %v229 = vmul.f32 %v105, %v223
    %v230 = vmul.f32 %v107, %v223
    %v231 = vmul.f32 %v109, %v223
    %v232 = vmul.f32 %v111, %v223
    %v233 = vmul.f32 %v113, %v223
    %v234 = vmul.f32 %v115, %v223
    %v235 = vmul.f32 %v117, %v223
    %v236 = vmul.f32 %v119, %v223
    %v237 = vmul.f32 %v121, %v223
    %v238 = vmul.f32 %v123, %v223
    %v239 = vmul.f32 %v125, %v223
    %v240 = vmul.f32 %v127, %v223
    %v241 = vmul.f32 %v129, %v223
    %v242 = vmul.f32 %v131, %v223
    %v243 = vmul.f32 %v133, %v223
    %v244 = vmul.f32 %v135, %v223
    %v245 = vmul.f32 %v137, %v223
    %v246 = vmul.f32 %v139, %v223
    %v247 = vmul.f32 %v141, %v223
    %v248 = vmul.f32 %v143, %v223
    %v249 = vmul.f32 %v145, %v223
    %v250 = vmul.f32 %v147, %v223
    %v251 = vmul.f32 %v149, %v223
    %v252 = vmul.f32 %v151, %v223
    %v253 = vmul.f32 %v153, %v223
    %v254 = vmul.f32 %v155, %v223
    %v255 = vmul.f32 %v157, %v223
    %v256 = vmul.f32 %v159, %v223
    %v257 = vmul.f32 %v161, %v223
    %v258 = vmul.f32 %v163, %v223
    %v259 = vmul.f32 %v165, %v223
    %v260 = vmul.f32 %v167, %v223
    %v261 = vmul.f32 %v169, %v223
    %v262 = vmul.f32 %v171, %v223
    %v263 = vmul.f32 %v173, %v223
    %v264 = vmul.f32 %v175, %v223
    %v265 = vmul.f32 %v177, %v223
    %v266 = vmul.f32 %v179, %v223
    %v267 = vmul.f32 %v181, %v223
    %v268 = vmul.f32 %v183, %v223
    %v269 = vmul.f32 %v185, %v223
    %v270 = vmul.f32 %v187, %v223
    %v271 = vmul.f32 %v189, %v223
    %v272 = vmul.f32 %v191, %v223
    %v273 = vmul.f32 %v193, %v223
    %v274 = vmul.f32 %v195, %v223
    %v275 = vmul.f32 %v197, %v223
    %v276 = vmul.f32 %v199, %v223
    %v277 = vmul.f32 %v201, %v223
    %v278 = vmul.f32 %v203, %v223
    %v279 = vmul.f32 %v205, %v223
    %v280 = vmul.f32 %v207, %v223
    %v281 = vmul.f32 %v209, %v223
    %v282 = vmul.f32 %v211, %v223
    %v283 = vmul.f32 %v213, %v223
    %v284 = vmul.f32 %v215, %v223
    %v285 = vmul.f32 %v217, %v223
    %v286 = vmul.f32 %v219, %v223
    %v287 = vmul.f32 %v221, %v223
    %v288 = vld [vmem:[%s1] sm:$0xff]
    %v289 = vld [vmem:[%s1 + $0x8] sm:$0xff]
    %v290 = vld [vmem:[%s1 + $0x10] sm:$0xff]
    %v291 = vld [vmem:[%s1 + $0x18] sm:$0xff]
    %v292 = vld [vmem:[%s1 + $0x20] sm:$0xff]
    %v293 = vld [vmem:[%s1 + $0x28] sm:$0xff]
    %v294 = vld [vmem:[%s1 + $0x30] sm:$0xff]
    %v295 = vld [vmem:[%s1 + $0x38] sm:$0xff]
    %v296 = vld [vmem:[%s1 + $0x40] sm:$0xff]
    %v297 = vld [vmem:[%s1 + $0x48] sm:$0xff]
    %v298 = vld [vmem:[%s1 + $0x50] sm:$0xff]
    %v299 = vld [vmem:[%s1 + $0x58] sm:$0xff]
    %v300 = vld [vmem:[%s1 + $0x60] sm:$0xff]
    %v301 = vld [vmem:[%s1 + $0x68] sm:$0xff]
    %v302 = vld [vmem:[%s1 + $0x70] sm:$0xff]
    %v303 = vld [vmem:[%s1 + $0x78] sm:$0xff]
    %s304 = sld [smem:[#allocation2]]
    %v305 = vstv %s304
    %v370 = vlaneseq
    %v371 = vand.u32 %v370, 127
    %v372 = vperm.slane %v224, %v371
    %v373 = vadd.s32 %v371, 4294967288
    %v374 = vperm.slane %v225, %v373
    %vm375 = vcmask 130112
    %v376 = vsel %vm375, %v374, %v372
    %v377 = vadd.s32 %v371, 4294967280
    %v378 = vperm.slane %v226, %v377
    %vm379 = vcmask 195712
    %v380 = vsel %vm379, %v378, %v376
    %v381 = vadd.s32 %v371, 4294967272
    %v382 = vperm.slane %v227, %v381
    %vm383 = vcmask 261312
    %v384 = vsel %vm383, %v382, %v380
    %v385 = vadd.s32 %v371, 4294967264
    %v386 = vperm.slane %v228, %v385
    %vm387 = vcmask 326912
    %v388 = vsel %vm387, %v386, %v384
    %v389 = vadd.s32 %v371, 4294967256
    %v390 = vperm.slane %v229, %v389
    %vm391 = vcmask 392512
    %v392 = vsel %vm391, %v390, %v388
    %v393 = vadd.s32 %v371, 4294967248
    %v394 = vperm.slane %v230, %v393
    %vm395 = vcmask 458112
    %v396 = vsel %vm395, %v394, %v392
    %v397 = vadd.s32 %v371, 4294967240
    %v398 = vperm.slane %v231, %v397
    %vm399 = vcmask 523712
    %v400 = vsel %vm399, %v398, %v396
    %v401 = vadd.s32 %v371, 4294967232
    %v402 = vperm.slane %v232, %v401
    %vm403 = vcmask 589312
    %v404 = vsel %vm403, %v402, %v400
    %v405 = vadd.s32 %v371, 4294967224
    %v406 = vperm.slane %v233, %v405
    %vm407 = vcmask 654912
    %v408 = vsel %vm407, %v406, %v404
    %v409 = vadd.s32 %v371, 4294967216
    %v410 = vperm.slane %v234, %v409
    %vm411 = vcmask 720512
    %v412 = vsel %vm411, %v410, %v408
    %v413 = vadd.s32 %v371, 4294967208
    %v414 = vperm.slane %v235, %v413
    %vm415 = vcmask 786112
    %v416 = vsel %vm415, %v414, %v412
    %v417 = vadd.s32 %v371, 4294967200
    %v418 = vperm.slane %v236, %v417
    %vm419 = vcmask 851712
    %v420 = vsel %vm419, %v418, %v416
    %v421 = vadd.s32 %v371, 4294967192
    %v422 = vperm.slane %v237, %v421
    %vm423 = vcmask 917312
    %v424 = vsel %vm423, %v422, %v420
    %v425 = vadd.s32 %v371, 4294967184
    %v426 = vperm.slane %v238, %v425
    %vm427 = vcmask 982912
    %v428 = vsel %vm427, %v426, %v424
    %v429 = vadd.s32 %v371, 4294967176
    %v430 = vperm.slane %v239, %v429
    %vm431 = vcmask 1048512
    %v432 = vsel %vm431, %v430, %v428
    %v433 = vperm.slane %v240, %v371
    %v434 = vperm.slane %v241, %v373
    %v435 = vsel %vm375, %v434, %v433
    %v436 = vperm.slane %v242, %v377
    %v437 = vsel %vm379, %v436, %v435
    %v438 = vperm.slane %v243, %v381
    %v439 = vsel %vm383, %v438, %v437
    %v440 = vperm.slane %v244, %v385
    %v441 = vsel %vm387, %v440, %v439
    %v442 = vperm.slane %v245, %v389
    %v443 = vsel %vm391, %v442, %v441
    %v444 = vperm.slane %v246, %v393
    %v445 = vsel %vm395, %v444, %v443
    %v446 = vperm.slane %v247, %v397
    %v447 = vsel %vm399, %v446, %v445
    %v448 = vperm.slane %v248, %v401
    %v449 = vsel %vm403, %v448, %v447
    %v450 = vperm.slane %v249, %v405
    %v451 = vsel %vm407, %v450, %v449
    %v452 = vperm.slane %v250, %v409
    %v453 = vsel %vm411, %v452, %v451
    %v454 = vperm.slane %v251, %v413
    %v455 = vsel %vm415, %v454, %v453
    %v456 = vperm.slane %v252, %v417
    %v457 = vsel %vm419, %v456, %v455
    %v458 = vperm.slane %v253, %v421
    %v459 = vsel %vm423, %v458, %v457
    %v460 = vperm.slane %v254, %v425
    %v461 = vsel %vm427, %v460, %v459
    %v462 = vperm.slane %v255, %v429
    %v463 = vsel %vm431, %v462, %v461
    %v464 = vperm.slane %v256, %v371
    %v465 = vperm.slane %v257, %v373
    %v466 = vsel %vm375, %v465, %v464
    %v467 = vperm.slane %v258, %v377
    %v468 = vsel %vm379, %v467, %v466
    %v469 = vperm.slane %v259, %v381
    %v470 = vsel %vm383, %v469, %v468
    %v471 = vperm.slane %v260, %v385
    %v472 = vsel %vm387, %v471, %v470
    %v473 = vperm.slane %v261, %v389
    %v474 = vsel %vm391, %v473, %v472
    %v475 = vperm.slane %v262, %v393
    %v476 = vsel %vm395, %v475, %v474
    %v477 = vperm.slane %v263, %v397
    %v478 = vsel %vm399, %v477, %v476
    %v479 = vperm.slane %v264, %v401
    %v480 = vsel %vm403, %v479, %v478
    %v481 = vperm.slane %v265, %v405
    %v482 = vsel %vm407, %v481, %v480
    %v483 = vperm.slane %v266, %v409
    %v484 = vsel %vm411, %v483, %v482
    %v485 = vperm.slane %v267, %v413
    %v486 = vsel %vm415, %v485, %v484
    %v487 = vperm.slane %v268, %v417
    %v488 = vsel %vm419, %v487, %v486
    %v489 = vperm.slane %v269, %v421
    %v490 = vsel %vm423, %v489, %v488
    %v491 = vperm.slane %v270, %v425
    %v492 = vsel %vm427, %v491, %v490
    %v493 = vperm.slane %v271, %v429
    %v494 = vsel %vm431, %v493, %v492
    %v495 = vperm.slane %v272, %v371
    %v496 = vperm.slane %v273, %v373
    %v497 = vsel %vm375, %v496, %v495
    %v498 = vperm.slane %v274, %v377
    %v499 = vsel %vm379, %v498, %v497
    %v500 = vperm.slane %v275, %v381
    %v501 = vsel %vm383, %v500, %v499
    %v502 = vperm.slane %v276, %v385
    %v503 = vsel %vm387, %v502, %v501
    %v504 = vperm.slane %v277, %v389
    %v505 = vsel %vm391, %v504, %v503
    %v506 = vperm.slane %v278, %v393
    %v507 = vsel %vm395, %v506, %v505
    %v508 = vperm.slane %v279, %v397
    %v509 = vsel %vm399, %v508, %v507
    %v510 = vperm.slane %v280, %v401
    %v511 = vsel %vm403, %v510, %v509
    %v512 = vperm.slane %v281, %v405
    %v513 = vsel %vm407, %v512, %v511
    %v514 = vperm.slane %v282, %v409
    %v515 = vsel %vm411, %v514, %v513
    %v516 = vperm.slane %v283, %v413
    %v517 = vsel %vm415, %v516, %v515
    %v518 = vperm.slane %v284, %v417
    %v519 = vsel %vm419, %v518, %v517
    %v520 = vperm.slane %v285, %v421
    %v521 = vsel %vm423, %v520, %v519
    %v522 = vperm.slane %v286, %v425
    %v523 = vsel %vm427, %v522, %v521
    %v524 = vperm.slane %v287, %v429
    %v525 = vsel %vm431, %v524, %v523
    %vm526 = vcmask 1041409
    %v527 = vsel %vm526, %v463, %v432
    %vm528 = vcmask 1042434
    %v529 = vsel %vm528, %v494, %v527
    %vm530 = vcmask 1043459
    %v531 = vsel %vm530, %v525, %v529
    %533 = vmatpush.msra.mxu0 %v303
    %534 = vmatpush.msra.mxu0 %v302
    %535 = vmatpush.msra.mxu0 %v301
    %536 = vmatpush.msra.mxu0 %v300
    %537 = vmatpush.msra.mxu0 %v299
    %538 = vmatpush.msra.mxu0 %v298
    %539 = vmatpush.msra.mxu0 %v297
    %540 = vmatpush.msra.mxu0 %v296
    %541 = vmatpush.msra.mxu0 %v295
    %542 = vmatpush.msra.mxu0 %v294
    %543 = vmatpush.msra.mxu0 %v293
    %544 = vmatpush.msra.mxu0 %v292
    %545 = vmatpush.msra.mxu0 %v291
    %546 = vmatpush.msra.mxu0 %v290
    %547 = vmatpush.msra.mxu0 %v289
    %548 = vmatpush.msra.mxu0 %v288
    %549 = vmatmul.f32.gmra.mxu0 %v531
    %v550 = vpop.f32.mrf.mxu0
    %v551 = vadd.f32 %v305, %v550
    %552 = vdwg.mxu0
    %v553 = vmax.f32 %v551, 0.0
    %v554 = vld [vmem:[%s2] sm:$0xff]
    %v555 = vld [vmem:[%s2 + $0x8] sm:$0xff]
    %v556 = vld [vmem:[%s2 + $0x10] sm:$0xff]
    %v557 = vld [vmem:[%s2 + $0x18] sm:$0xff]
    %v558 = vld [vmem:[%s2 + $0x20] sm:$0xff]
    %v559 = vld [vmem:[%s2 + $0x28] sm:$0xff]
    %v560 = vld [vmem:[%s2 + $0x30] sm:$0xff]
    %v561 = vld [vmem:[%s2 + $0x38] sm:$0xff]
    %v562 = vld [vmem:[%s2 + $0x40] sm:$0xff]
    %v563 = vld [vmem:[%s2 + $0x48] sm:$0xff]
    %v564 = vld [vmem:[%s2 + $0x50] sm:$0xff]
    %v565 = vld [vmem:[%s2 + $0x58] sm:$0xff]
    %v566 = vld [vmem:[%s2 + $0x60] sm:$0xff]
    %v567 = vld [vmem:[%s2 + $0x68] sm:$0xff]
    %v568 = vld [vmem:[%s2 + $0x70] sm:$0xff]
    %v569 = vld [vmem:[%s2 + $0x78] sm:$0xff]
    %s570 = sld [smem:[#allocation2 + $0x1]]
    %v571 = vstv %s570
    %572 = vmatpush.msra.mxu0 %v569
    %573 = vmatpush.msra.mxu0 %v568
    %574 = vmatpush.msra.mxu0 %v567
    %575 = vmatpush.msra.mxu0 %v566
    %576 = vmatpush.msra.mxu0 %v565
    %577 = vmatpush.msra.mxu0 %v564
    %578 = vmatpush.msra.mxu0 %v563
    %579 = vmatpush.msra.mxu0 %v562
    %580 = vmatpush.msra.mxu0 %v561
    %581 = vmatpush.msra.mxu0 %v560
    %582 = vmatpush.msra.mxu0 %v559
    %583 = vmatpush.msra.mxu0 %v558
    %584 = vmatpush.msra.mxu0 %v557
    %585 = vmatpush.msra.mxu0 %v556
    %586 = vmatpush.msra.mxu0 %v555
    %587 = vmatpush.msra.mxu0 %v554
    %588 = vmatmul.f32.gmra.mxu0 %v553
    %v589 = vpop.f32.mrf.mxu0
    %v590 = vadd.f32 %v571, %v589
    %591 = vdwg.mxu0
    %v592 = vmax.f32 %v590, 0.0
    %v593 = vadd.f32 %v553, %v592
    %v594 = vadd.f32 %v593, %v531
    %s595 = sld [smem:[#allocation2 + $0x2]]
    %v596 = vstv %s595
    %v597 = vmul.f32 %v594, %v596
    %s598 = sld [smem:[#allocation2 + $0x3]]
    %v599 = vstv %s598
    %v600 = vadd.f32 %v597, %v599
    %v601 = vsub.f32 0.0, %v600
    %v602 = vmul.f32 %v601, 1.442695
    %v603 = vpow.pop %v602
    %v604 = vadd.f32 %v603, 1.0
    %v605 = vrcp.pop %v604
    %v606 = vperm.slane %v605, 0
    %v607 = vlaneseq
    %v608 = vshrl.u32 %v607, 7
    %610 = vset.pattern.permute.xlu0 %v608
    %611 = vperm.xlu0 %610, %v606
    %v612 = vpop.permute.xlu0 %611
    %v613 = vlaneseq
    %v614 = vshrl.u32 %v613, 7
    %v615 = vadd.s32 %v614, 8
    %616 = vset.pattern.permute.xlu0 %v615
    %617 = vperm.xlu0 %616, %v606
    %v618 = vpop.permute.xlu0 %617
    %v619 = vlaneseq
    %v620 = vshrl.u32 %v619, 7
    %v621 = vadd.s32 %v620, 16
    %622 = vset.pattern.permute.xlu0 %v621
    %623 = vperm.xlu0 %622, %v606
    %v624 = vpop.permute.xlu0 %623
    %v625 = vlaneseq
    %v626 = vshrl.u32 %v625, 7
    %v627 = vadd.s32 %v626, 24
    %628 = vset.pattern.permute.xlu0 %v627
    %629 = vperm.xlu0 %628, %v606
    %v630 = vpop.permute.xlu0 %629
    %v631 = vlaneseq
    %v632 = vshrl.u32 %v631, 7
    %v633 = vadd.s32 %v632, 32
    %634 = vset.pattern.permute.xlu0 %v633
    %635 = vperm.xlu0 %634, %v606
    %v636 = vpop.permute.xlu0 %635
    %v637 = vlaneseq
    %v638 = vshrl.u32 %v637, 7
    %v639 = vadd.s32 %v638, 40
    %640 = vset.pattern.permute.xlu0 %v639
    %641 = vperm.xlu0 %640, %v606
    %v642 = vpop.permute.xlu0 %641
    %v643 = vlaneseq
    %v644 = vshrl.u32 %v643, 7
    %v645 = vadd.s32 %v644, 48
    %646 = vset.pattern.permute.xlu0 %v645
    %647 = vperm.xlu0 %646, %v606
    %v648 = vpop.permute.xlu0 %647
    %v649 = vlaneseq
    %v650 = vshrl.u32 %v649, 7
    %v651 = vadd.s32 %v650, 56
    %652 = vset.pattern.permute.xlu0 %v651
    %653 = vperm.xlu0 %652, %v606
    %v654 = vpop.permute.xlu0 %653
    %v655 = vlaneseq
    %v656 = vshrl.u32 %v655, 7
    %v657 = vadd.s32 %v656, 64
    %658 = vset.pattern.permute.xlu0 %v657
    %659 = vperm.xlu0 %658, %v606
    %v660 = vpop.permute.xlu0 %659
    %v661 = vlaneseq
    %v662 = vshrl.u32 %v661, 7
    %v663 = vadd.s32 %v662, 72
    %664 = vset.pattern.permute.xlu0 %v663
    %665 = vperm.xlu0 %664, %v606
    %v666 = vpop.permute.xlu0 %665
    %v667 = vlaneseq
    %v668 = vshrl.u32 %v667, 7
    %v669 = vadd.s32 %v668, 80
    %670 = vset.pattern.permute.xlu0 %v669
    %671 = vperm.xlu0 %670, %v606
    %v672 = vpop.permute.xlu0 %671
    %v673 = vlaneseq
    %v674 = vshrl.u32 %v673, 7
    %v675 = vadd.s32 %v674, 88
    %676 = vset.pattern.permute.xlu0 %v675
    %677 = vperm.xlu0 %676, %v606
    %v678 = vpop.permute.xlu0 %677
    %v679 = vlaneseq
    %v680 = vshrl.u32 %v679, 7
    %v681 = vadd.s32 %v680, 96
    %682 = vset.pattern.permute.xlu0 %v681
    %683 = vperm.xlu0 %682, %v606
    %v684 = vpop.permute.xlu0 %683
    %v685 = vlaneseq
    %v686 = vshrl.u32 %v685, 7
    %v687 = vadd.s32 %v686, 104
    %688 = vset.pattern.permute.xlu0 %v687
    %689 = vperm.xlu0 %688, %v606
    %v690 = vpop.permute.xlu0 %689
    %v691 = vlaneseq
    %v692 = vshrl.u32 %v691, 7
    %v693 = vadd.s32 %v692, 112
    %694 = vset.pattern.permute.xlu0 %v693
    %695 = vperm.xlu0 %694, %v606
    %v696 = vpop.permute.xlu0 %695
    %v697 = vlaneseq
    %v698 = vshrl.u32 %v697, 7
    %v699 = vadd.s32 %v698, 120
    %700 = vset.pattern.permute.xlu0 %v699
    %701 = vperm.xlu0 %700, %v606
    %v702 = vpop.permute.xlu0 %701
    %v703 = vperm.slane %v605, 1
    %v704 = vlaneseq
    %v705 = vshrl.u32 %v704, 7
    %707 = vset.pattern.permute.xlu0 %v705
    %708 = vperm.xlu0 %707, %v703
    %v709 = vpop.permute.xlu0 %708
    %v710 = vlaneseq
    %v711 = vshrl.u32 %v710, 7
    %v712 = vadd.s32 %v711, 8
    %713 = vset.pattern.permute.xlu0 %v712
    %714 = vperm.xlu0 %713, %v703
    %v715 = vpop.permute.xlu0 %714
    %v716 = vlaneseq
    %v717 = vshrl.u32 %v716, 7
    %v718 = vadd.s32 %v717, 16
    %719 = vset.pattern.permute.xlu0 %v718
    %720 = vperm.xlu0 %719, %v703
    %v721 = vpop.permute.xlu0 %720
    %v722 = vlaneseq
    %v723 = vshrl.u32 %v722, 7
    %v724 = vadd.s32 %v723, 24
    %725 = vset.pattern.permute.xlu0 %v724
    %726 = vperm.xlu0 %725, %v703
    %v727 = vpop.permute.xlu0 %726
    %v728 = vlaneseq
    %v729 = vshrl.u32 %v728, 7
    %v730 = vadd.s32 %v729, 32
    %731 = vset.pattern.permute.xlu0 %v730
    %732 = vperm.xlu0 %731, %v703
    %v733 = vpop.permute.xlu0 %732
    %v734 = vlaneseq
    %v735 = vshrl.u32 %v734, 7
    %v736 = vadd.s32 %v735, 40
    %737 = vset.pattern.permute.xlu0 %v736
    %738 = vperm.xlu0 %737, %v703
    %v739 = vpop.permute.xlu0 %738
    %v740 = vlaneseq
    %v741 = vshrl.u32 %v740, 7
    %v742 = vadd.s32 %v741, 48
    %743 = vset.pattern.permute.xlu0 %v742
    %744 = vperm.xlu0 %743, %v703
    %v745 = vpop.permute.xlu0 %744
    %v746 = vlaneseq
    %v747 = vshrl.u32 %v746, 7
    %v748 = vadd.s32 %v747, 56
    %749 = vset.pattern.permute.xlu0 %v748
    %750 = vperm.xlu0 %749, %v703
    %v751 = vpop.permute.xlu0 %750
    %v752 = vlaneseq
    %v753 = vshrl.u32 %v752, 7
    %v754 = vadd.s32 %v753, 64
    %755 = vset.pattern.permute.xlu0 %v754
    %756 = vperm.xlu0 %755, %v703
    %v757 = vpop.permute.xlu0 %756
    %v758 = vlaneseq
    %v759 = vshrl.u32 %v758, 7
    %v760 = vadd.s32 %v759, 72
    %761 = vset.pattern.permute.xlu0 %v760
    %762 = vperm.xlu0 %761, %v703
    %v763 = vpop.permute.xlu0 %762
    %v764 = vlaneseq
    %v765 = vshrl.u32 %v764, 7
    %v766 = vadd.s32 %v765, 80
    %767 = vset.pattern.permute.xlu0 %v766
    %768 = vperm.xlu0 %767, %v703
    %v769 = vpop.permute.xlu0 %768
    %v770 = vlaneseq
    %v771 = vshrl.u32 %v770, 7
    %v772 = vadd.s32 %v771, 88
    %773 = vset.pattern.permute.xlu0 %v772
    %774 = vperm.xlu0 %773, %v703
    %v775 = vpop.permute.xlu0 %774
    %v776 = vlaneseq
    %v777 = vshrl.u32 %v776, 7
    %v778 = vadd.s32 %v777, 96
    %779 = vset.pattern.permute.xlu0 %v778
    %780 = vperm.xlu0 %779, %v703
    %v781 = vpop.permute.xlu0 %780
    %v782 = vlaneseq
    %v783 = vshrl.u32 %v782, 7
    %v784 = vadd.s32 %v783, 104
    %785 = vset.pattern.permute.xlu0 %v784
    %786 = vperm.xlu0 %785, %v703
    %v787 = vpop.permute.xlu0 %786
    %v788 = vlaneseq
    %v789 = vshrl.u32 %v788, 7
    %v790 = vadd.s32 %v789, 112
    %791 = vset.pattern.permute.xlu0 %v790
    %792 = vperm.xlu0 %791, %v703
    %v793 = vpop.permute.xlu0 %792
    %v794 = vlaneseq
    %v795 = vshrl.u32 %v794, 7
    %v796 = vadd.s32 %v795, 120
    %797 = vset.pattern.permute.xlu0 %v796
    %798 = vperm.xlu0 %797, %v703
    %v799 = vpop.permute.xlu0 %798
    %v800 = vperm.slane %v605, 2
    %v801 = vlaneseq
    %v802 = vshrl.u32 %v801, 7
    %804 = vset.pattern.permute.xlu0 %v802
    %805 = vperm.xlu0 %804, %v800
    %v806 = vpop.permute.xlu0 %805
    %v807 = vlaneseq
    %v808 = vshrl.u32 %v807, 7
    %v809 = vadd.s32 %v808, 8
    %810 = vset.pattern.permute.xlu0 %v809
    %811 = vperm.xlu0 %810, %v800
    %v812 = vpop.permute.xlu0 %811
    %v813 = vlaneseq
    %v814 = vshrl.u32 %v813, 7
    %v815 = vadd.s32 %v814, 16
    %816 = vset.pattern.permute.xlu0 %v815
    %817 = vperm.xlu0 %816, %v800
    %v818 = vpop.permute.xlu0 %817
    %v819 = vlaneseq
    %v820 = vshrl.u32 %v819, 7
    %v821 = vadd.s32 %v820, 24
    %822 = vset.pattern.permute.xlu0 %v821
    %823 = vperm.xlu0 %822, %v800
    %v824 = vpop.permute.xlu0 %823
    %v825 = vlaneseq
    %v826 = vshrl.u32 %v825, 7
    %v827 = vadd.s32 %v826, 32
    %828 = vset.pattern.permute.xlu0 %v827
    %829 = vperm.xlu0 %828, %v800
    %v830 = vpop.permute.xlu0 %829
    %v831 = vlaneseq
    %v832 = vshrl.u32 %v831, 7
    %v833 = vadd.s32 %v832, 40
    %834 = vset.pattern.permute.xlu0 %v833
    %835 = vperm.xlu0 %834, %v800
    %v836 = vpop.permute.xlu0 %835
    %v837 = vlaneseq
    %v838 = vshrl.u32 %v837, 7
    %v839 = vadd.s32 %v838, 48
    %840 = vset.pattern.permute.xlu0 %v839
    %841 = vperm.xlu0 %840, %v800
    %v842 = vpop.permute.xlu0 %841
    %v843 = vlaneseq
    %v844 = vshrl.u32 %v843, 7
    %v845 = vadd.s32 %v844, 56
    %846 = vset.pattern.permute.xlu0 %v845
    %847 = vperm.xlu0 %846, %v800
    %v848 = vpop.permute.xlu0 %847
    %v849 = vlaneseq
    %v850 = vshrl.u32 %v849, 7
    %v851 = vadd.s32 %v850, 64
    %852 = vset.pattern.permute.xlu0 %v851
    %853 = vperm.xlu0 %852, %v800
    %v854 = vpop.permute.xlu0 %853
    %v855 = vlaneseq
    %v856 = vshrl.u32 %v855, 7
    %v857 = vadd.s32 %v856, 72
    %858 = vset.pattern.permute.xlu0 %v857
    %859 = vperm.xlu0 %858, %v800
    %v860 = vpop.permute.xlu0 %859
    %v861 = vlaneseq
    %v862 = vshrl.u32 %v861, 7
    %v863 = vadd.s32 %v862, 80
    %864 = vset.pattern.permute.xlu0 %v863
    %865 = vperm.xlu0 %864, %v800
    %v866 = vpop.permute.xlu0 %865
    %v867 = vlaneseq
    %v868 = vshrl.u32 %v867, 7
    %v869 = vadd.s32 %v868, 88
    %870 = vset.pattern.permute.xlu0 %v869
    %871 = vperm.xlu0 %870, %v800
    %v872 = vpop.permute.xlu0 %871
    %v873 = vlaneseq
    %v874 = vshrl.u32 %v873, 7
    %v875 = vadd.s32 %v874, 96
    %876 = vset.pattern.permute.xlu0 %v875
    %877 = vperm.xlu0 %876, %v800
    %v878 = vpop.permute.xlu0 %877
    %v879 = vlaneseq
    %v880 = vshrl.u32 %v879, 7
    %v881 = vadd.s32 %v880, 104
    %882 = vset.pattern.permute.xlu0 %v881
    %883 = vperm.xlu0 %882, %v800
    %v884 = vpop.permute.xlu0 %883
    %v885 = vlaneseq
    %v886 = vshrl.u32 %v885, 7
    %v887 = vadd.s32 %v886, 112
    %888 = vset.pattern.permute.xlu0 %v887
    %889 = vperm.xlu0 %888, %v800
    %v890 = vpop.permute.xlu0 %889
    %v891 = vlaneseq
    %v892 = vshrl.u32 %v891, 7
    %v893 = vadd.s32 %v892, 120
    %894 = vset.pattern.permute.xlu0 %v893
    %895 = vperm.xlu0 %894, %v800
    %v896 = vpop.permute.xlu0 %895
    %v897 = vperm.slane %v605, 3
    %v898 = vlaneseq
    %v899 = vshrl.u32 %v898, 7
    %901 = vset.pattern.permute.xlu0 %v899
    %902 = vperm.xlu0 %901, %v897
    %v903 = vpop.permute.xlu0 %902
    %v904 = vlaneseq
    %v905 = vshrl.u32 %v904, 7
    %v906 = vadd.s32 %v905, 8
    %907 = vset.pattern.permute.xlu0 %v906
    %908 = vperm.xlu0 %907, %v897
    %v909 = vpop.permute.xlu0 %908
    %v910 = vlaneseq
    %v911 = vshrl.u32 %v910, 7
    %v912 = vadd.s32 %v911, 16
    %913 = vset.pattern.permute.xlu0 %v912
    %914 = vperm.xlu0 %913, %v897
    %v915 = vpop.permute.xlu0 %914
    %v916 = vlaneseq
    %v917 = vshrl.u32 %v916, 7
    %v918 = vadd.s32 %v917, 24
    %919 = vset.pattern.permute.xlu0 %v918
    %920 = vperm.xlu0 %919, %v897
    %v921 = vpop.permute.xlu0 %920
    %v922 = vlaneseq
    %v923 = vshrl.u32 %v922, 7
    %v924 = vadd.s32 %v923, 32
    %925 = vset.pattern.permute.xlu0 %v924
    %926 = vperm.xlu0 %925, %v897
    %v927 = vpop.permute.xlu0 %926
    %v928 = vlaneseq
    %v929 = vshrl.u32 %v928, 7
    %v930 = vadd.s32 %v929, 40
    %931 = vset.pattern.permute.xlu0 %v930
    %932 = vperm.xlu0 %931, %v897
    %v933 = vpop.permute.xlu0 %932
    %v934 = vlaneseq
    %v935 = vshrl.u32 %v934, 7
    %v936 = vadd.s32 %v935, 48
    %937 = vset.pattern.permute.xlu0 %v936
    %938 = vperm.xlu0 %937, %v897
    %v939 = vpop.permute.xlu0 %938
    %v940 = vlaneseq
    %v941 = vshrl.u32 %v940, 7
    %v942 = vadd.s32 %v941, 56
    %943 = vset.pattern.permute.xlu0 %v942
    %944 = vperm.xlu0 %943, %v897
    %v945 = vpop.permute.xlu0 %944
    %v946 = vlaneseq
    %v947 = vshrl.u32 %v946, 7
    %v948 = vadd.s32 %v947, 64
    %949 = vset.pattern.permute.xlu0 %v948
    %950 = vperm.xlu0 %949, %v897
    %v951 = vpop.permute.xlu0 %950
    %v952 = vlaneseq
    %v953 = vshrl.u32 %v952, 7
    %v954 = vadd.s32 %v953, 72
    %955 = vset.pattern.permute.xlu0 %v954
    %956 = vperm.xlu0 %955, %v897
    %v957 = vpop.permute.xlu0 %956
    %v958 = vlaneseq
    %v959 = vshrl.u32 %v958, 7
    %v960 = vadd.s32 %v959, 80
    %961 = vset.pattern.permute.xlu0 %v960
    %962 = vperm.xlu0 %961, %v897
    %v963 = vpop.permute.xlu0 %962
    %v964 = vlaneseq
    %v965 = vshrl.u32 %v964, 7
    %v966 = vadd.s32 %v965, 88
    %967 = vset.pattern.permute.xlu0 %v966
    %968 = vperm.xlu0 %967, %v897
    %v969 = vpop.permute.xlu0 %968
    %v970 = vlaneseq
    %v971 = vshrl.u32 %v970, 7
    %v972 = vadd.s32 %v971, 96
    %973 = vset.pattern.permute.xlu0 %v972
    %974 = vperm.xlu0 %973, %v897
    %v975 = vpop.permute.xlu0 %974
    %v976 = vlaneseq
    %v977 = vshrl.u32 %v976, 7
    %v978 = vadd.s32 %v977, 104
    %979 = vset.pattern.permute.xlu0 %v978
    %980 = vperm.xlu0 %979, %v897
    %v981 = vpop.permute.xlu0 %980
    %v982 = vlaneseq
    %v983 = vshrl.u32 %v982, 7
    %v984 = vadd.s32 %v983, 112
    %985 = vset.pattern.permute.xlu0 %v984
    %986 = vperm.xlu0 %985, %v897
    %v987 = vpop.permute.xlu0 %986
    %v988 = vlaneseq
    %v989 = vshrl.u32 %v988, 7
    %v990 = vadd.s32 %v989, 120
    %991 = vset.pattern.permute.xlu0 %v990
    %992 = vperm.xlu0 %991, %v897
    %v993 = vpop.permute.xlu0 %992
    %v994 = vmul.f32 %v30, %v612
    %v995 = vmul.f32 %v31, %v618
    %v996 = vmul.f32 %v32, %v624
    %v997 = vmul.f32 %v33, %v630
    %v998 = vmul.f32 %v34, %v636
    %v999 = vmul.f32 %v35, %v642
    %v1000 = vmul.f32 %v36, %v648
    %v1001 = vmul.f32 %v37, %v654
    %v1002 = vmul.f32 %v38, %v660
    %v1003 = vmul.f32 %v39, %v666
    %v1004 = vmul.f32 %v40, %v672
    %v1005 = vmul.f32 %v41, %v678
    %v1006 = vmul.f32 %v42, %v684
    %v1007 = vmul.f32 %v43, %v690
    %v1008 = vmul.f32 %v44, %v696
    %v1009 = vmul.f32 %v45, %v702
    %v1010 = vmul.f32 %v46, %v709
    %v1011 = vmul.f32 %v47, %v715
    %v1012 = vmul.f32 %v48, %v721
    %v1013 = vmul.f32 %v49, %v727
    %v1014 = vmul.f32 %v50, %v733
    %v1015 = vmul.f32 %v51, %v739
    %v1016 = vmul.f32 %v52, %v745
    %v1017 = vmul.f32 %v53, %v751
    %v1018 = vmul.f32 %v54, %v757
    %v1019 = vmul.f32 %v55, %v763
    %v1020 = vmul.f32 %v56, %v769
    %v1021 = vmul.f32 %v57, %v775
    %v1022 = vmul.f32 %v58, %v781
    %v1023 = vmul.f32 %v59, %v787
    %v1024 = vmul.f32 %v60, %v793
    %v1025 = vmul.f32 %v61, %v799
    %v1026 = vmul.f32 %v62, %v806
    %v1027 = vmul.f32 %v63, %v812
    %v1028 = vmul.f32 %v64, %v818
    %v1029 = vmul.f32 %v65, %v824
    %v1030 = vmul.f32 %v66, %v830
    %v1031 = vmul.f32 %v67, %v836
    %v1032 = vmul.f32 %v68, %v842
    %v1033 = vmul.f32 %v69, %v848
    %v1034 = vmul.f32 %v70, %v854
    %v1035 = vmul.f32 %v71, %v860
    %v1036 = vmul.f32 %v72, %v866
    %v1037 = vmul.f32 %v73, %v872
    %v1038 = vmul.f32 %v74, %v878
    %v1039 = vmul.f32 %v75, %v884
    %v1040 = vmul.f32 %v76, %v890
    %v1041 = vmul.f32 %v77, %v896
    %v1042 = vmul.f32 %v78, %v903
    %v1043 = vmul.f32 %v79, %v909
    %v1044 = vmul.f32 %v80, %v915
    %v1045 = vmul.f32 %v81, %v921
    %v1046 = vmul.f32 %v82, %v927
    %v1047 = vmul.f32 %v83, %v933
    %v1048 = vmul.f32 %v84, %v939
    %v1049 = vmul.f32 %v85, %v945
    %v1050 = vmul.f32 %v86, %v951
    %v1051 = vmul.f32 %v87, %v957
    %v1052 = vmul.f32 %v88, %v963
    %v1053 = vmul.f32 %v89, %v969
    %v1054 = vmul.f32 %v90, %v975
    %v1055 = vmul.f32 %v91, %v981
    %v1056 = vmul.f32 %v92, %v987
    %v1057 = vmul.f32 %v93, %v993
    %1058 = vst [vmem:[%s4] sm:$0xff] %v994
    %1059 = vst [vmem:[%s4 + $0x8] sm:$0xff] %v995
    %1060 = vst [vmem:[%s4 + $0x10] sm:$0xff] %v996
    %1061 = vst [vmem:[%s4 + $0x18] sm:$0xff] %v997
    %1062 = vst [vmem:[%s4 + $0x20] sm:$0xff] %v998
    %1063 = vst [vmem:[%s4 + $0x28] sm:$0xff] %v999
    %1064 = vst [vmem:[%s4 + $0x30] sm:$0xff] %v1000
    %1065 = vst [vmem:[%s4 + $0x38] sm:$0xff] %v1001
    %1066 = vst [vmem:[%s4 + $0x40] sm:$0xff] %v1002
    %1067 = vst [vmem:[%s4 + $0x48] sm:$0xff] %v1003
    %1068 = vst [vmem:[%s4 + $0x50] sm:$0xff] %v1004
    %1069 = vst [vmem:[%s4 + $0x58] sm:$0xff] %v1005
    %1070 = vst [vmem:[%s4 + $0x60] sm:$0xff] %v1006
    %1071 = vst [vmem:[%s4 + $0x68] sm:$0xff] %v1007
    %1072 = vst [vmem:[%s4 + $0x70] sm:$0xff] %v1008
    %1073 = vst [vmem:[%s4 + $0x78] sm:$0xff] %v1009
    %1074 = vst [vmem:[%s4 + $0x80] sm:$0xff] %v1010
    %1075 = vst [vmem:[%s4 + $0x88] sm:$0xff] %v1011
    %1076 = vst [vmem:[%s4 + $0x90] sm:$0xff] %v1012
    %1077 = vst [vmem:[%s4 + $0x98] sm:$0xff] %v1013
    %1078 = vst [vmem:[%s4 + $0xa0] sm:$0xff] %v1014
    %1079 = vst [vmem:[%s4 + $0xa8] sm:$0xff] %v1015
    %1080 = vst [vmem:[%s4 + $0xb0] sm:$0xff] %v1016
    %1081 = vst [vmem:[%s4 + $0xb8] sm:$0xff] %v1017
    %1082 = vst [vmem:[%s4 + $0xc0] sm:$0xff] %v1018
    %1083 = vst [vmem:[%s4 + $0xc8] sm:$0xff] %v1019
    %1084 = vst [vmem:[%s4 + $0xd0] sm:$0xff] %v1020
    %1085 = vst [vmem:[%s4 + $0xd8] sm:$0xff] %v1021
    %1086 = vst [vmem:[%s4 + $0xe0] sm:$0xff] %v1022
    %1087 = vst [vmem:[%s4 + $0xe8] sm:$0xff] %v1023
    %1088 = vst [vmem:[%s4 + $0xf0] sm:$0xff] %v1024
    %1089 = vst [vmem:[%s4 + $0xf8] sm:$0xff] %v1025
    %1090 = vst [vmem:[%s4 + $0x100] sm:$0xff] %v1026
    %1091 = vst [vmem:[%s4 + $0x108] sm:$0xff] %v1027
    %1092 = vst [vmem:[%s4 + $0x110] sm:$0xff] %v1028
    %1093 = vst [vmem:[%s4 + $0x118] sm:$0xff] %v1029
    %1094 = vst [vmem:[%s4 + $0x120] sm:$0xff] %v1030
    %1095 = vst [vmem:[%s4 + $0x128] sm:$0xff] %v1031
    %1096 = vst [vmem:[%s4 + $0x130] sm:$0xff] %v1032
    %1097 = vst [vmem:[%s4 + $0x138] sm:$0xff] %v1033
    %1098 = vst [vmem:[%s4 + $0x140] sm:$0xff] %v1034
    %1099 = vst [vmem:[%s4 + $0x148] sm:$0xff] %v1035
    %1100 = vst [vmem:[%s4 + $0x150] sm:$0xff] %v1036
    %1101 = vst [vmem:[%s4 + $0x158] sm:$0xff] %v1037
    %1102 = vst [vmem:[%s4 + $0x160] sm:$0xff] %v1038
    %1103 = vst [vmem:[%s4 + $0x168] sm:$0xff] %v1039
    %1104 = vst [vmem:[%s4 + $0x170] sm:$0xff] %v1040
    %1105 = vst [vmem:[%s4 + $0x178] sm:$0xff] %v1041
    %1106 = vst [vmem:[%s4 + $0x180] sm:$0xff] %v1042
    %1107 = vst [vmem:[%s4 + $0x188] sm:$0xff] %v1043
    %1108 = vst [vmem:[%s4 + $0x190] sm:$0xff] %v1044
    %1109 = vst [vmem:[%s4 + $0x198] sm:$0xff] %v1045
    %1110 = vst [vmem:[%s4 + $0x1a0] sm:$0xff] %v1046
    %1111 = vst [vmem:[%s4 + $0x1a8] sm:$0xff] %v1047
    %1112 = vst [vmem:[%s4 + $0x1b0] sm:$0xff] %v1048
    %1113 = vst [vmem:[%s4 + $0x1b8] sm:$0xff] %v1049
    %1114 = vst [vmem:[%s4 + $0x1c0] sm:$0xff] %v1050
    %1115 = vst [vmem:[%s4 + $0x1c8] sm:$0xff] %v1051
    %1116 = vst [vmem:[%s4 + $0x1d0] sm:$0xff] %v1052
    %1117 = vst [vmem:[%s4 + $0x1d8] sm:$0xff] %v1053
    %1118 = vst [vmem:[%s4 + $0x1e0] sm:$0xff] %v1054
    %1119 = vst [vmem:[%s4 + $0x1e8] sm:$0xff] %v1055
    %1120 = vst [vmem:[%s4 + $0x1f0] sm:$0xff] %v1056
    %1121 = vst [vmem:[%s4 + $0x1f8] sm:$0xff] %v1057
    // Predicated region
    $region22: #{_lambda_.1} parent=1 // pred_check
      _
    $region23: #{_lambda_.1} parent=1 // pred_check_branch
      %1123 = sbr.rel (0) target = $region25
    $region24: #{_lambda_.1} parent=1 // pred_region
      _
    $region25: #{_lambda_.1} parent=1 // pred_fallthru
      _
    // Predicated region
    $region26: #{_lambda_.1} parent=1 // pred_check
      _
    $region27: #{_lambda_.1} parent=1 // pred_check_branch
      %1125 = sbr.rel (0) target = $region29
    $region28: #{_lambda_.1} parent=1 // pred_region
      _
    $region29: #{_lambda_.1} parent=1 // pred_fallthru
      _
    %1126 = vsyncpa [#allocation3], 1

</llo_original>
